<compile_context>
chip_gen: v7x
topology: tpu7x:2x2x1
jax: 0.10.0
libtpu: 0.0.40
codegen_flags: <defaults>
</compile_context>

<pallas_src>
import functools

import jax
import jax.numpy as jnp
from jax.experimental import pallas as pl
from jax.experimental.pallas import tpu as pltpu


def _round_up(n: int, m: int) -> int:
    return ((n + m - 1) // m) * m


def mlp_kernel(xT_ref, w1_ref, b1_ref, w2_ref, b2_ref, w3_ref, b3_ref, out_ref):
    # xT: (4, TILE_B) bf16  (feature-major: batch on the 128-lane axis)
    xT = xT_ref[...]

    # Layer 1: (20, 4) @ (4, TB) -> (20, TB), f32 accumulate, bias + ReLU in f32
    h1 = jnp.dot(w1_ref[...], xT, preferred_element_type=jnp.float32) + b1_ref[...]
    h1 = jnp.maximum(h1, 0.0)

    # Layer 2: (30, 20) @ (20, TB) -> (30, TB)
    h2 = jnp.dot(w2_ref[...], h1.astype(w2_ref.dtype),
                 preferred_element_type=jnp.float32) + b2_ref[...]
    h2 = jnp.maximum(h2, 0.0)

    # Layer 3 (logits): (3, 30) @ (30, TB) -> (3, TB); lane-dense output store
    out = jnp.dot(w3_ref[...], h2.astype(w3_ref.dtype),
                  preferred_element_type=jnp.float32) + b3_ref[...]
    out_ref[...] = out.astype(out_ref.dtype)


@functools.partial(jax.jit, static_argnames=("tile_b",))
def mynet_forward(x, params, *, tile_b: int = 4096):
    """x: (B, 4) float32. params: torch-layout weights. Returns (B, 3) f32 logits."""
    w1, b1 = params["w1"], params["b1"]   # (20, 4),  (20, 1)
    w2, b2 = params["w2"], params["b2"]   # (30, 20), (30, 1)
    w3, b3 = params["w3"], params["b3"]   # (3, 30),  (3, 1)

    B = x.shape[0]
    # Batch tile: multiple of 128 lanes, clamped so a tiny batch uses one small tile.
    tb = _round_up(min(tile_b, _round_up(B, 128)), 128)
    B_pad = _round_up(B, tb)

    # Feature-major activations, padded batch (zero rows are sliced off at the end).
    xT = x.T                                            # (4, B)
    if B_pad != B:
        xT = jnp.pad(xT, ((0, 0), (0, B_pad - B)))
    xT = xT.astype(jnp.bfloat16)                        # halve HBM traffic for x
    w1b = w1.astype(jnp.bfloat16)
    w2b = w2.astype(jnp.bfloat16)
    w3b = w3.astype(jnp.bfloat16)

    grid = (B_pad // tb,)

    # Weights/biases: constant index_map -> stay resident in VMEM across the grid.
    resident = lambda shape: pl.BlockSpec(shape, lambda i: (0, 0))

    cost = pl.CostEstimate(
        flops=2 * B_pad * (4 * 20 + 20 * 30 + 30 * 3),
        transcendentals=0,
        bytes_accessed=(xT.size * 2 + B_pad * 3 * 4
                        + (w1b.size + w2b.size + w3b.size) * 2
                        + (b1.size + b2.size + b3.size) * 4),
    )

    outT = pl.pallas_call(
        mlp_kernel,
        out_shape=jax.ShapeDtypeStruct((3, B_pad), jnp.float32),
        grid=grid,
        in_specs=[
            pl.BlockSpec((4, tb), lambda i: (0, i)),    # activation tile (streamed)
            resident((20, 4)), resident((20, 1)),
            resident((30, 20)), resident((30, 1)),
            resident((3, 30)), resident((3, 1)),
        ],
        out_specs=pl.BlockSpec((3, tb), lambda i: (0, i)),
        compiler_params=pltpu.CompilerParams(
            dimension_semantics=("parallel",),          # megacore sharding on v7x
        ),
        cost_estimate=cost,
    )(xT, w1b, b1, w2b, b2, w3b, b3)

    # Back to the torch-style (B, 3) row-major logits.
    return outT[:, :B].T


def init_params(key):
    """Deterministic init mimicking torch.nn.Linear default U[-1/sqrt(fan_in), 1/sqrt(fan_in)].

    Weights stored torch-style as (out_features, in_features); biases as (out_features, 1).
    """
    dims = [(4, 20), (20, 30), (30, 3)]
    params = {}
    for i, (fan_in, fan_out) in enumerate(dims, start=1):
        key, kw, kb = jax.random.split(key, 3)
        bound = 1.0 / jnp.sqrt(jnp.float32(fan_in))
        params[f"w{i}"] = jax.random.uniform(
            kw, (fan_out, fan_in), jnp.float32, minval=-bound, maxval=bound
        )
        params[f"b{i}"] = jax.random.uniform(
            kb, (fan_out, 1), jnp.float32, minval=-bound, maxval=bound
        )
    return params


def reference_forward(x, params):
    """Pure-JAX reference mirroring the kernel's dtype pattern (bf16 dot inputs, f32 accum)."""
    c = lambda a: a.astype(jnp.bfloat16)
    h1 = jnp.dot(c(x), c(params["w1"]).T,
                 preferred_element_type=jnp.float32) + params["b1"].T
    h1 = jnp.maximum(h1, 0.0)
    h2 = jnp.dot(c(h1), c(params["w2"]).T,
                 preferred_element_type=jnp.float32) + params["b2"].T
    h2 = jnp.maximum(h2, 0.0)
    return jnp.dot(c(h2), c(params["w3"]).T,
                   preferred_element_type=jnp.float32) + params["b3"].T


if __name__ == "__main__":
    key = jax.random.PRNGKey(0)
    key, kx = jax.random.split(key)

    # Iris-like input: batch of 8 samples, 4 features each.
    x = jax.random.normal(kx, (8, 4), dtype=jnp.float32)
    params = init_params(key)

    out = mynet_forward(x, params)
    out = jax.block_until_ready(out)

    ref = reference_forward(x, params)
    assert out.shape == (8, 3)
    assert jnp.allclose(out, ref, atol=1e-3, rtol=1e-3), "Pallas output mismatch"

    print("KERNEL_OK")
</pallas_src>

<mosaic_0001>
module attributes {stable_mosaic.version = 11 : i64} {
  func.func @mlp_kernel(%arg0: i32, %arg1: memref<4x128xbf16, #tpu.memory_space<vmem>>, %arg2: memref<20x4xbf16, #tpu.memory_space<vmem>>, %arg3: memref<20x1xf32, #tpu.memory_space<vmem>>, %arg4: memref<30x20xbf16, #tpu.memory_space<vmem>>, %arg5: memref<30x1xf32, #tpu.memory_space<vmem>>, %arg6: memref<3x30xbf16, #tpu.memory_space<vmem>>, %arg7: memref<3x1xf32, #tpu.memory_space<vmem>>, %arg8: memref<3x128xf32, #tpu.memory_space<vmem>>) attributes {dimension_semantics = [#tpu.dimension_semantics<parallel>], iteration_bounds = array<i64: 1>, scalar_prefetch = 0 : i64, scratch_operands = 0 : i64, tpu.core_type = #tpu.core_type<tc>, window_params = [{transform_indices = @transform_0, window_bounds = array<i64: 4, 128>}, {pipeline_mode = #tpu.pipeline_mode<synchronous>, transform_indices = @transform_1, window_bounds = array<i64: 20, 4>}, {pipeline_mode = #tpu.pipeline_mode<synchronous>, transform_indices = @transform_2, window_bounds = array<i64: 20, 1>}, {pipeline_mode = #tpu.pipeline_mode<synchronous>, transform_indices = @transform_3, window_bounds = array<i64: 30, 20>}, {pipeline_mode = #tpu.pipeline_mode<synchronous>, transform_indices = @transform_4, window_bounds = array<i64: 30, 1>}, {pipeline_mode = #tpu.pipeline_mode<synchronous>, transform_indices = @transform_5, window_bounds = array<i64: 3, 30>}, {pipeline_mode = #tpu.pipeline_mode<synchronous>, transform_indices = @transform_6, window_bounds = array<i64: 3, 1>}, {transform_indices = @transform_7, window_bounds = array<i64: 3, 128>}]} {
    %c0 = arith.constant 0 : index
    %c0_0 = arith.constant 0 : index
    %0 = vector.load %arg1[%c0, %c0_0] : memref<4x128xbf16, #tpu.memory_space<vmem>>, vector<4x128xbf16>
    %c0_1 = arith.constant 0 : index
    %c0_2 = arith.constant 0 : index
    %1 = vector.load %arg2[%c0_1, %c0_2] : memref<20x4xbf16, #tpu.memory_space<vmem>>, vector<20x4xbf16>
    %cst = arith.constant dense<0.000000e+00> : vector<20x128xf32>
    %2 = tpu.matmul %1, %0, %cst {dimension_numbers = #tpu.dot_dimension_numbers<[1], [0], [0], [1], [0, 0, 1, 1], [], []>} : vector<20x4xbf16>, vector<4x128xbf16>, vector<20x128xf32> -> vector<20x128xf32>
    %c0_3 = arith.constant 0 : index
    %c0_4 = arith.constant 0 : index
    %3 = vector.load %arg3[%c0_3, %c0_4] : memref<20x1xf32, #tpu.memory_space<vmem>>, vector<20x1xf32>
    %4 = vector.broadcast %3 : vector<20x1xf32> to vector<20x128xf32>
    %5 = arith.addf %2, %4 : vector<20x128xf32>
    %cst_5 = arith.constant 0.000000e+00 : f32
    %6 = vector.broadcast %cst_5 : f32 to vector<20x128xf32>
    %7 = arith.maximumf %5, %6 : vector<20x128xf32>
    %c0_6 = arith.constant 0 : index
    %c0_7 = arith.constant 0 : index
    %8 = vector.load %arg4[%c0_6, %c0_7] : memref<30x20xbf16, #tpu.memory_space<vmem>>, vector<30x20xbf16>
    %9 = arith.truncf %7 : vector<20x128xf32> to vector<20x128xbf16>
    %cst_8 = arith.constant dense<0.000000e+00> : vector<30x128xf32>
    %10 = tpu.matmul %8, %9, %cst_8 {dimension_numbers = #tpu.dot_dimension_numbers<[1], [0], [0], [1], [0, 0, 1, 1], [], []>} : vector<30x20xbf16>, vector<20x128xbf16>, vector<30x128xf32> -> vector<30x128xf32>
    %c0_9 = arith.constant 0 : index
    %c0_10 = arith.constant 0 : index
    %11 = vector.load %arg5[%c0_9, %c0_10] : memref<30x1xf32, #tpu.memory_space<vmem>>, vector<30x1xf32>
    %12 = vector.broadcast %11 : vector<30x1xf32> to vector<30x128xf32>
    %13 = arith.addf %10, %12 : vector<30x128xf32>
    %cst_11 = arith.constant 0.000000e+00 : f32
    %14 = vector.broadcast %cst_11 : f32 to vector<30x128xf32>
    %15 = arith.maximumf %13, %14 : vector<30x128xf32>
    %c0_12 = arith.constant 0 : index
    %c0_13 = arith.constant 0 : index
    %16 = vector.load %arg6[%c0_12, %c0_13] : memref<3x30xbf16, #tpu.memory_space<vmem>>, vector<3x30xbf16>
    %17 = arith.truncf %15 : vector<30x128xf32> to vector<30x128xbf16>
    %cst_14 = arith.constant dense<0.000000e+00> : vector<3x128xf32>
    %18 = tpu.matmul %16, %17, %cst_14 {dimension_numbers = #tpu.dot_dimension_numbers<[1], [0], [0], [1], [0, 0, 1, 1], [], []>} : vector<3x30xbf16>, vector<30x128xbf16>, vector<3x128xf32> -> vector<3x128xf32>
    %c0_15 = arith.constant 0 : index
    %c0_16 = arith.constant 0 : index
    %19 = vector.load %arg7[%c0_15, %c0_16] : memref<3x1xf32, #tpu.memory_space<vmem>>, vector<3x1xf32>
    %20 = vector.broadcast %19 : vector<3x1xf32> to vector<3x128xf32>
    %21 = arith.addf %18, %20 : vector<3x128xf32>
    %c0_17 = arith.constant 0 : index
    %c0_18 = arith.constant 0 : index
    %22 = vector.load %arg8[%c0_17, %c0_18] : memref<3x128xf32, #tpu.memory_space<vmem>>, vector<3x128xf32>
    tpu.vector_store %arg8[%c0_17, %c0_18], %21 {strides = array<i32>} : memref<3x128xf32, #tpu.memory_space<vmem>>, vector<3x128xf32>,
    return
  }
  func.func @transform_0(%arg0: i32) -> (i32, i32) {
    %c0_i32 = arith.constant 0 : i32
    %c0_i32_0 = arith.constant 0 : i32
    return %c0_i32, %arg0 : i32, i32
  }
  func.func @transform_1(%arg0: i32) -> (i32, i32) {
    %c0_i32 = arith.constant 0 : i32
    %c0_i32_0 = arith.constant 0 : i32
    %c0_i32_1 = arith.constant 0 : i32
    return %c0_i32, %c0_i32_0 : i32, i32
  }
  func.func @transform_2(%arg0: i32) -> (i32, i32) {
    %c0_i32 = arith.constant 0 : i32
    %c0_i32_0 = arith.constant 0 : i32
    %c0_i32_1 = arith.constant 0 : i32
    return %c0_i32, %c0_i32_0 : i32, i32
  }
  func.func @transform_3(%arg0: i32) -> (i32, i32) {
    %c0_i32 = arith.constant 0 : i32
    %c0_i32_0 = arith.constant 0 : i32
    %c0_i32_1 = arith.constant 0 : i32
    return %c0_i32, %c0_i32_0 : i32, i32
  }
  func.func @transform_4(%arg0: i32) -> (i32, i32) {
    %c0_i32 = arith.constant 0 : i32
    %c0_i32_0 = arith.constant 0 : i32
    %c0_i32_1 = arith.constant 0 : i32
    return %c0_i32, %c0_i32_0 : i32, i32
  }
  func.func @transform_5(%arg0: i32) -> (i32, i32) {
    %c0_i32 = arith.constant 0 : i32
    %c0_i32_0 = arith.constant 0 : i32
    %c0_i32_1 = arith.constant 0 : i32
    return %c0_i32, %c0_i32_0 : i32, i32
  }
  func.func @transform_6(%arg0: i32) -> (i32, i32) {
    %c0_i32 = arith.constant 0 : i32
    %c0_i32_0 = arith.constant 0 : i32
    %c0_i32_1 = arith.constant 0 : i32
    return %c0_i32, %c0_i32_0 : i32, i32
  }
  func.func @transform_7(%arg0: i32) -> (i32, i32) {
    %c0_i32 = arith.constant 0 : i32
    %c0_i32_0 = arith.constant 0 : i32
    return %c0_i32, %arg0 : i32, i32
  }
}

</mosaic_0001>

<llo_original>
// kernel: mynet_forward.1
$region0: #{mynet_forward.1}
  #allocation0 [shape = 'u32[]', space=smem, size = 0x4, offset = 0x4, fixed_abs, tag = 'smem constant byte address 0x4 - core index']
  #allocation1 [shape = 'u32[144,128]{1,0:T(1,128)}', space=vmem, size = 0x12000, scoped, tag = 'internal scratch']
  %s0 = inlined_call_operand.vmem [shape: bf16[4,128], index: 0, kind: input, shape index: {}]
  %s1 = inlined_call_operand.vmem [shape: bf16[20,4], index: 1, kind: input, shape index: {}]
  %s2 = inlined_call_operand.vmem [shape: f32[20,1], index: 2, kind: input, shape index: {}]
  %s3 = inlined_call_operand.vmem [shape: bf16[30,20], index: 3, kind: input, shape index: {}]
  %s4 = inlined_call_operand.vmem [shape: f32[30,1], index: 4, kind: input, shape index: {}]
  %s5 = inlined_call_operand.vmem [shape: bf16[3,30], index: 5, kind: input, shape index: {}]
  %s6 = inlined_call_operand.vmem [shape: f32[3,1], index: 6, kind: input, shape index: {}]
  %s7 = inlined_call_operand.vmem [shape: f32[3,128], index: 7, kind: output, shape index: {}]
  %s8 = sld [smem:[#allocation0]]
  $region38: #{mynet_forward.1} parent=0
    _
  %s10 = ssub.s32 1, %s8
  %s11 = scalar_select 0, %s10, %s8
  // Predicated region
  $region2: #{mynet_forward.1} parent=0 // pred_check
    _
  $region3: #{mynet_forward.1} parent=0 // pred_check_branch
    %13 = sbr.rel (0) target = $region5
  $region4: #{mynet_forward.1} parent=0 // pred_region
    _
  $region5: #{mynet_forward.1} parent=0 // pred_fallthru
    _
  // Predicated region
  $region6: #{mynet_forward.1} parent=0 // pred_check
    _
  $region7: #{mynet_forward.1} parent=0 // pred_check_branch
    %15 = sbr.rel (0) target = $region9
  $region8: #{mynet_forward.1} parent=0 // pred_region
    _
  $region9: #{mynet_forward.1} parent=0 // pred_fallthru
    _
  // Predicated region
  $region10: #{mynet_forward.1} parent=0 // pred_check
    _
  $region11: #{mynet_forward.1} parent=0 // pred_check_branch
    %17 = sbr.rel (0) target = $region13
  $region12: #{mynet_forward.1} parent=0 // pred_region
    _
  $region13: #{mynet_forward.1} parent=0 // pred_fallthru
    _
  // Predicated region
  $region14: #{mynet_forward.1} parent=0 // pred_check
    _
  $region15: #{mynet_forward.1} parent=0 // pred_check_branch
    %19 = sbr.rel (0) target = $region17
  $region16: #{mynet_forward.1} parent=0 // pred_region
    _
  $region17: #{mynet_forward.1} parent=0 // pred_fallthru
    _
  // Predicated region
  $region18: #{mynet_forward.1} parent=0 // pred_check
    _
  $region19: #{mynet_forward.1} parent=0 // pred_check_branch
    %21 = sbr.rel (0) target = $region21
  $region20: #{mynet_forward.1} parent=0 // pred_region
    _
  $region21: #{mynet_forward.1} parent=0 // pred_fallthru
    _
  // Predicated region
  $region22: #{mynet_forward.1} parent=0 // pred_check
    _
  $region23: #{mynet_forward.1} parent=0 // pred_check_branch
    %23 = sbr.rel (0) target = $region25
  $region24: #{mynet_forward.1} parent=0 // pred_region
    _
  $region25: #{mynet_forward.1} parent=0 // pred_fallthru
    _
  // Predicated region
  $region26: #{mynet_forward.1} parent=0 // pred_check
    _
  $region27: #{mynet_forward.1} parent=0 // pred_check_branch
    %25 = sbr.rel (0) target = $region29
  $region28: #{mynet_forward.1} parent=0 // pred_region
    _
  $region29: #{mynet_forward.1} parent=0 // pred_fallthru
    _
  %v27 = vld [vmem:[%s0] sm:$0x3]
  %v28 = vld [vmem:[%s1] sm:$0xf]
  %v29 = vld [vmem:[%s1 + $0x4] sm:$0xf]
  %v30 = vld [vmem:[%s1 + $0x8] sm:$0x3]
  %v31 = vld [vmem:[%s2] sm:$0xff]
  %v32 = vld [vmem:[%s2 + $0x8] sm:$0xff]
  %v33 = vld [vmem:[%s2 + $0x10] sm:$0xf]
  %35 = vset.pattern.permute.xlu0 0
  %36 = vperm.xlu0 %35, %v31
  %v37 = vpop.permute.xlu0 %36
  %40 = vset.pattern.permute.xlu0 0
  %41 = vperm.xlu0 %40, %v32
  %v42 = vpop.permute.xlu0 %41
  %45 = vset.pattern.permute.xlu0 0
  %46 = vperm.xlu0 %45, %v33
  %v47 = vpop.permute.xlu0 %46
  %v52 = vunpack.c.l.b16 %v28
  %v53 = vunpack.c.l.b16 %v29
  %v54 = vunpack.c.l.b16 %v30
  %v55 = vpack.c.b16 %v53, %v52
  %v56 = vpack.c.b16 %v54, %v54
  %vm57 = vcmask 31744
  %v59 = vsel %vm57, %v55, 0
  %v62 = vsel %vm57, %v56, 0
  %vm64 = vcmask 1041408
  %v66 = vsel %vm64, %v27, 0
  %68 = vmatprep.subr.bf16.mxu0 0
  %69 = vmatpush1.bf16.msra.mxu0 %v66
  %70 = vmatprep.subr.bf16.mxu0 0
  %71 = vmatpush1.bf16.msra.mxu0 0
  %72 = vmatprep.subr.bf16.mxu0 0
  %73 = vmatpush1.bf16.msra.mxu0 0
  %74 = vmatprep.subr.bf16.mxu0 0
  %75 = vmatpush1.bf16.msra.mxu0 0
  %76 = vmatprep.subr.bf16.mxu0 0
  %77 = vmatpush1.bf16.msra.mxu0 0
  %78 = vmatprep.subr.bf16.mxu0 0
  %79 = vmatpush1.bf16.msra.mxu0 0
  %80 = vmatprep.subr.bf16.mxu0 0
  %81 = vmatpush1.bf16.msra.mxu0 0
  %82 = vmatprep.subr.bf16.mxu0 0
  %83 = vmatpush1.bf16.msra.mxu0 0
  %84 = vmatprep.subr.bf16.mxu0 0
  %85 = vmatpush1.bf16.msra.mxu0 0
  %86 = vmatprep.subr.bf16.mxu0 0
  %87 = vmatpush1.bf16.msra.mxu0 0
  %88 = vmatprep.subr.bf16.mxu0 0
  %89 = vmatpush1.bf16.msra.mxu0 0
  %90 = vmatprep.subr.bf16.mxu0 0
  %91 = vmatpush1.bf16.msra.mxu0 0
  %92 = vmatprep.subr.bf16.mxu0 0
  %93 = vmatpush1.bf16.msra.mxu0 0
  %94 = vmatprep.subr.bf16.mxu0 0
  %95 = vmatpush1.bf16.msra.mxu0 0
  %96 = vmatprep.subr.bf16.mxu0 0
  %97 = vmatpush1.bf16.msra.mxu0 0
  %98 = vmatprep.subr.bf16.mxu0 0
  %99 = vmatpush1.bf16.msra.mxu0 0
  %100 = vmatprep.mubr.bf16.mxu0 0
  %101 = vmatmul.mubr.bf16.gmra.mrb[0].mxu0 %v59
  %v102 = vpop.f32.mrb[0].mxu0
  %v103 = vadd.f32 %v37, %v102
  %v104 = vpop.f32.mrb[0].mxu0
  %v105 = vpop.f32.mrb[0].mxu0
  %v106 = vadd.f32 %v42, %v105
  %v107 = vpop.f32.mrb[0].mxu0
  %108 = vmatprep.mubr.bf16.mxu0 0
  %109 = vmatmul.mubr.bf16.gmra.mrb[0].mxu0 %v62
  %v110 = vpop.f32.mrb[0].mxu0
  %v111 = vadd.f32 %v47, %v110
  %v112 = vpop.f32.mrb[0].mxu0
  %v113 = vpop.f32.mrb[0].mxu0
  %v114 = vpop.f32.mrb[0].mxu0
  %115 = vdwg.mxu0
  %v116 = vmax.f32 %v103, 0.0
  %v117 = vmax.f32 %v106, 0.0
  %v118 = vmax.f32 %v111, 0.0
  %v119 = vld [vmem:[%s3] sm:$0xf]
  %v120 = vld [vmem:[%s3 + $0x4] sm:$0xf]
  %v121 = vld [vmem:[%s3 + $0x8] sm:$0xf]
  %v122 = vld [vmem:[%s3 + $0xc] sm:$0x7]
  %v123 = vpack.c.bf16 %v117, %v116
  %v124 = vpack.c.bf16 %v118, %v118
  %v125 = vld [vmem:[%s4] sm:$0xff]
  %v126 = vld [vmem:[%s4 + $0x8] sm:$0xff]
  %v127 = vld [vmem:[%s4 + $0x10] sm:$0xff]
  %v128 = vld [vmem:[%s4 + $0x18] sm:$0x3f]
  %130 = vset.pattern.permute.xlu0 0
  %131 = vperm.xlu0 %130, %v125
  %v132 = vpop.permute.xlu0 %131
  %135 = vset.pattern.permute.xlu0 0
  %136 = vperm.xlu0 %135, %v126
  %v137 = vpop.permute.xlu0 %136
  %140 = vset.pattern.permute.xlu0 0
  %141 = vperm.xlu0 %140, %v127
  %v142 = vpop.permute.xlu0 %141
  %145 = vset.pattern.permute.xlu0 0
  %146 = vperm.xlu0 %145, %v128
  %v147 = vpop.permute.xlu0 %146
  %v153 = vunpack.c.l.b16 %v119
  %v154 = vunpack.c.l.b16 %v120
  %v155 = vunpack.c.l.b16 %v121
  %v156 = vunpack.c.l.b16 %v122
  %v157 = vpack.c.b16 %v154, %v153
  %v158 = vpack.c.b16 %v156, %v155
  %vm159 = vcmask 162816
  %v161 = vsel %vm159, %v157, 0
  %v164 = vsel %vm159, %v158, 0
  %v167 = vsel %vm64, %v124, 0
  %169 = vmatprep.subr.bf16.mxu0 0
  %170 = vmatpush1.bf16.msra.mxu0 %v123
  %171 = vmatprep.subr.bf16.mxu0 0
  %172 = vmatpush1.bf16.msra.mxu0 %v167
  %173 = vmatprep.subr.bf16.mxu0 0
  %174 = vmatpush1.bf16.msra.mxu0 0
  %175 = vmatprep.subr.bf16.mxu0 0
  %176 = vmatpush1.bf16.msra.mxu0 0
  %177 = vmatprep.subr.bf16.mxu0 0
  %178 = vmatpush1.bf16.msra.mxu0 0
  %179 = vmatprep.subr.bf16.mxu0 0
  %180 = vmatpush1.bf16.msra.mxu0 0
  %181 = vmatprep.subr.bf16.mxu0 0
  %182 = vmatpush1.bf16.msra.mxu0 0
  %183 = vmatprep.subr.bf16.mxu0 0
  %184 = vmatpush1.bf16.msra.mxu0 0
  %185 = vmatprep.subr.bf16.mxu0 0
  %186 = vmatpush1.bf16.msra.mxu0 0
  %187 = vmatprep.subr.bf16.mxu0 0
  %188 = vmatpush1.bf16.msra.mxu0 0
  %189 = vmatprep.subr.bf16.mxu0 0
  %190 = vmatpush1.bf16.msra.mxu0 0
  %191 = vmatprep.subr.bf16.mxu0 0
  %192 = vmatpush1.bf16.msra.mxu0 0
  %193 = vmatprep.subr.bf16.mxu0 0
  %194 = vmatpush1.bf16.msra.mxu0 0
  %195 = vmatprep.subr.bf16.mxu0 0
  %196 = vmatpush1.bf16.msra.mxu0 0
  %197 = vmatprep.subr.bf16.mxu0 0
  %198 = vmatpush1.bf16.msra.mxu0 0
  %199 = vmatprep.subr.bf16.mxu0 0
  %200 = vmatpush1.bf16.msra.mxu0 0
  %201 = vmatprep.mubr.bf16.mxu0 0
  %202 = vmatmul.mubr.bf16.gmra.mrb[0].mxu0 %v161
  %v203 = vpop.f32.mrb[0].mxu0
  %v204 = vadd.f32 %v132, %v203
  %v205 = vpop.f32.mrb[0].mxu0
  %v206 = vpop.f32.mrb[0].mxu0
  %v207 = vadd.f32 %v137, %v206
  %v208 = vpop.f32.mrb[0].mxu0
  %209 = vmatprep.mubr.bf16.mxu0 0
  %210 = vmatmul.mubr.bf16.gmra.mrb[0].mxu0 %v164
  %v211 = vpop.f32.mrb[0].mxu0
  %v212 = vadd.f32 %v142, %v211
  %v213 = vpop.f32.mrb[0].mxu0
  %v214 = vpop.f32.mrb[0].mxu0
  %v215 = vadd.f32 %v147, %v214
  %v216 = vpop.f32.mrb[0].mxu0
  %217 = vdwg.mxu0
  %v218 = vmax.f32 %v204, 0.0
  %v219 = vmax.f32 %v207, 0.0
  %v220 = vmax.f32 %v212, 0.0
  %v221 = vmax.f32 %v215, 0.0
  %v222 = vld [vmem:[%s5] sm:$0x3]
  %v223 = vpack.c.bf16 %v219, %v218
  %v224 = vpack.c.bf16 %v221, %v220
  %v225 = vld [vmem:[%s6] sm:$0x7]
  %227 = vset.pattern.permute.xlu0 0
  %228 = vperm.xlu0 %227, %v225
  %v229 = vpop.permute.xlu0 %228
  %vm231 = vcmask 244736
  %v233 = vsel %vm231, %v222, 0
  %vm235 = vcmask 1046528
  %v237 = vsel %vm235, %v224, 0
  %239 = vmatprep.subr.bf16.mxu0 0
  %240 = vmatpush1.bf16.msra.mxu0 %v223
  %241 = vmatprep.subr.bf16.mxu0 0
  %242 = vmatpush1.bf16.msra.mxu0 %v237
  %243 = vmatprep.subr.bf16.mxu0 0
  %244 = vmatpush1.bf16.msra.mxu0 0
  %245 = vmatprep.subr.bf16.mxu0 0
  %246 = vmatpush1.bf16.msra.mxu0 0
  %247 = vmatprep.subr.bf16.mxu0 0
  %248 = vmatpush1.bf16.msra.mxu0 0
  %249 = vmatprep.subr.bf16.mxu0 0
  %250 = vmatpush1.bf16.msra.mxu0 0
  %251 = vmatprep.subr.bf16.mxu0 0
  %252 = vmatpush1.bf16.msra.mxu0 0
  %253 = vmatprep.subr.bf16.mxu0 0
  %254 = vmatpush1.bf16.msra.mxu0 0
  %255 = vmatprep.subr.bf16.mxu0 0
  %256 = vmatpush1.bf16.msra.mxu0 0
  %257 = vmatprep.subr.bf16.mxu0 0
  %258 = vmatpush1.bf16.msra.mxu0 0
  %259 = vmatprep.subr.bf16.mxu0 0
  %260 = vmatpush1.bf16.msra.mxu0 0
  %261 = vmatprep.subr.bf16.mxu0 0
  %262 = vmatpush1.bf16.msra.mxu0 0
  %263 = vmatprep.subr.bf16.mxu0 0
  %264 = vmatpush1.bf16.msra.mxu0 0
  %265 = vmatprep.subr.bf16.mxu0 0
  %266 = vmatpush1.bf16.msra.mxu0 0
  %267 = vmatprep.subr.bf16.mxu0 0
  %268 = vmatpush1.bf16.msra.mxu0 0
  %269 = vmatprep.subr.bf16.mxu0 0
  %270 = vmatpush1.bf16.msra.mxu0 0
  %271 = vmatprep.mubr.bf16.mxu0 0
  %272 = vmatmul.mubr.bf16.gmra.mrb[0].mxu0 %v233
  %v273 = vpop.f32.mrb[0].mxu0
  %v274 = vadd.f32 %v229, %v273
  %v275 = vpop.f32.mrb[0].mxu0
  %v276 = vpop.f32.mrb[0].mxu0
  %v277 = vpop.f32.mrb[0].mxu0
  %278 = vdwg.mxu0
  %279 = vst [vmem:[%s7] sm:$0x7] %v274
  // Predicated region
  $region30: #{mynet_forward.1} parent=0 // pred_check
    _
  $region31: #{mynet_forward.1} parent=0 // pred_check_branch
    %281 = sbr.rel (0) target = $region33
  $region32: #{mynet_forward.1} parent=0 // pred_region
    _
  $region33: #{mynet_forward.1} parent=0 // pred_fallthru
    _
  // Predicated region
  $region34: #{mynet_forward.1} parent=0 // pred_check
    _
  $region35: #{mynet_forward.1} parent=0 // pred_check_branch
    %283 = sbr.rel (0) target = $region37
  $region36: #{mynet_forward.1} parent=0 // pred_region
    _
  $region37: #{mynet_forward.1} parent=0 // pred_fallthru
    _

</llo_original>
